<compile_context>
chip_gen: v5e
topology: v5e:2x2
jax: 0.10.0
libtpu: 0.0.40
codegen_flags: <defaults>
</compile_context>

<pallas_src>
import functools
import math

import jax
import jax.numpy as jnp
from jax.experimental import pallas as pl
from jax.experimental.pallas import tpu as pltpu


def _choose_tile(total: int, target: int) -> int:
    """Largest multiple-of-8 divisor of `total` that is <= target, else `total` itself.

    The full-`total` fallback is always legal for this kernel because the whole sequence is
    VMEM-resident anyway (x row + K/V scratch), so it cannot blow the budget disproportionately.
    """
    if total <= target:
        return total
    t = (target // 8) * 8
    while t >= 8:
        if total % t == 0:
            return t
        t -= 8
    return total


# --------------------------------------------------------------------------------------
# Fused kernel: QKV projection + per-head softmax attention + residual + LayerNorm
# --------------------------------------------------------------------------------------
def _fused_mha_ln_kernel(x_ref, wq_ref, wk_ref, wv_ref, gamma_ref, o_ref,
                         k_sc, v_sc, acc_sc, *, n_heads, q_tile, proj_tile, eps):
    qi = pl.program_id(1)
    T, C = k_sc.shape
    D = C // n_heads

    # ---- K/V projection for the whole batch row, once per batch (first q tile) ----
    @pl.when(qi == 0)
    def _():
        n_proj = T // proj_tile
        for t in range(n_proj):                      # static trip count, static row slices
            rows = slice(t * proj_tile, (t + 1) * proj_tile)
            xt = x_ref[0, rows, :]                   # (Tp, C) native dtype -> MXU
            k_sc[rows, :] = jnp.dot(
                xt, wk_ref[...], preferred_element_type=jnp.float32).astype(k_sc.dtype)
            v_sc[rows, :] = jnp.dot(
                xt, wv_ref[...], preferred_element_type=jnp.float32).astype(v_sc.dtype)

    # ---- Q projection for this q tile (1/sqrt(D) already folded into Wq) ----
    q0 = pl.multiple_of(qi * q_tile, q_tile)
    xq = x_ref[0, pl.ds(q0, q_tile), :]                                  # (Tq, C)
    q = jnp.dot(xq, wq_ref[...], preferred_element_type=jnp.float32).astype(xq.dtype)

    # ---- Per-head attention; each head's output lands in its lane slice of acc_sc ----
    for h in range(n_heads):
        cols = slice(h * D, (h + 1) * D)
        qh = q[:, cols]                                                  # (Tq, D)
        kh = k_sc[:, cols]                                               # (T, D)
        vh = v_sc[:, cols]                                               # (T, D)
        s = jnp.dot(qh, kh.T, preferred_element_type=jnp.float32)        # (Tq, T) f32
        m = jnp.max(s, axis=-1, keepdims=True)
        p = jnp.exp(s - m)
        l = jnp.sum(p, axis=-1, keepdims=True)
        pv = jnp.dot(p.astype(vh.dtype), vh, preferred_element_type=jnp.float32)
        acc_sc[:, cols] = pv * pl.reciprocal(l, approx=False)

    # ---- Residual add + LayerNorm (f32, biased variance, weight only) ----
    y = acc_sc[...] + xq.astype(jnp.float32)
    mean = jnp.mean(y, axis=-1, keepdims=True)
    yc = y - mean
    var = jnp.mean(yc * yc, axis=-1, keepdims=True)
    out = yc * jax.lax.rsqrt(var + eps) * gamma_ref[...].astype(jnp.float32)
    o_ref[0] = out.astype(o_ref.dtype)


# --------------------------------------------------------------------------------------
# Wrapper
# --------------------------------------------------------------------------------------
def multi_head_attention(x, wqkv, gamma, *, n_heads, eps=1e-5,
                         q_tile=256, proj_tile=256, compute_dtype=None):
    """x: (B, T, C), wqkv: (C, 3C) (applied as x @ Wqkv), gamma: (C,) -> (B, T, C)."""
    B, T, C = x.shape
    H = n_heads
    assert C % H == 0
    D = C // H
    out_dtype = x.dtype

    if compute_dtype is None:
        compute_dtype = x.dtype
    compute_dtype = jnp.dtype(compute_dtype)

    # Host-side weight prep: split Wqkv, fold the 1/sqrt(D) scale into Wq.
    scale = 1.0 / math.sqrt(D)
    wq = (wqkv[:, :C] * scale).astype(compute_dtype)
    wk = wqkv[:, C:2 * C].astype(compute_dtype)
    wv = wqkv[:, 2 * C:].astype(compute_dtype)
    xc = x.astype(compute_dtype)
    gamma2d = gamma.reshape(1, C)

    Tq = _choose_tile(T, q_tile)
    Tp = _choose_tile(T, proj_tile)
    nq = T // Tq

    comp_isz = compute_dtype.itemsize
    out_isz = jnp.dtype(out_dtype).itemsize

    # VMEM budget estimate (x row / weights / out tiles double-buffered, K/V/acc scratch,
    # headroom for the per-head (Tq, T) f32 score temporaries), clamped to chip capacity.
    est = (2 * T * C * comp_isz          # x row (double-buffered across b)
           + 2 * 3 * C * C * comp_isz    # resident Wq/Wk/Wv (conservatively x2)
           + 2 * Tq * C * out_isz        # output tiles
           + 2 * T * C * comp_isz        # K/V scratch
           + Tq * C * 4                  # f32 head-output accumulator
           + 2 * Tq * T * 4)             # score temporaries
    est = int(est * 1.5) + (2 << 20)
    try:
        cap = int(getattr(pltpu.get_tpu_info(), "vmem_capacity_bytes", 64 * 1024 * 1024))
    except Exception:
        cap = 64 * 1024 * 1024
    vmem_limit = int(max(32 * 1024 * 1024, min(est, (cap * 3) // 4)))

    kernel = functools.partial(_fused_mha_ln_kernel, n_heads=H, q_tile=Tq,
                               proj_tile=Tp, eps=eps)

    flops = B * (6 * T * C * C + 4 * T * T * C)
    bytes_accessed = int(B * T * C * comp_isz + 3 * C * C * comp_isz + C * 4
                         + B * T * C * out_isz)

    out = pl.pallas_call(
        kernel,
        out_shape=jax.ShapeDtypeStruct((B, T, C), out_dtype),
        grid_spec=pltpu.PrefetchScalarGridSpec(
            num_scalar_prefetch=0,
            grid=(B, nq),
            in_specs=[
                pl.BlockSpec((1, T, C), lambda b, qi: (b, 0, 0)),   # full x row (resident per b)
                pl.BlockSpec((C, C), lambda b, qi: (0, 0)),         # Wq (VMEM-resident)
                pl.BlockSpec((C, C), lambda b, qi: (0, 0)),         # Wk (VMEM-resident)
                pl.BlockSpec((C, C), lambda b, qi: (0, 0)),         # Wv (VMEM-resident)
                pl.BlockSpec((1, C), lambda b, qi: (0, 0)),         # gamma (VMEM-resident)
            ],
            out_specs=pl.BlockSpec((1, Tq, C), lambda b, qi: (b, qi, 0)),
            scratch_shapes=[
                pltpu.VMEM((T, C), compute_dtype),   # K for the whole batch row
                pltpu.VMEM((T, C), compute_dtype),   # V for the whole batch row
                pltpu.VMEM((Tq, C), jnp.float32),    # per-q-tile head-output accumulator
            ],
        ),
        compiler_params=pltpu.CompilerParams(
            dimension_semantics=("parallel", "arbitrary"),
            vmem_limit_bytes=vmem_limit,
        ),
        cost_estimate=pl.CostEstimate(
            flops=flops,
            transcendentals=B * H * T * T,
            bytes_accessed=bytes_accessed,
        ),
    )(xc, wq, wk, wv, gamma2d)
    return out


# --------------------------------------------------------------------------------------
# Plain-JAX reference mirroring the PyTorch forward (eval mode, no mask)
# --------------------------------------------------------------------------------------
def _reference(x, wqkv, gamma, n_heads, eps=1e-5):
    B, T, C = x.shape
    D = C // n_heads
    qkv = jnp.einsum("btc,cd->btd", x, wqkv)
    q, k, v = jnp.split(qkv, 3, axis=-1)

    def to_heads(t):
        return t.reshape(B, T, n_heads, D).transpose(0, 2, 1, 3)

    q, k, v = to_heads(q), to_heads(k), to_heads(v)
    att = jnp.einsum("bhtd,bhsd->bhts", q, k) / math.sqrt(D)
    att = jax.nn.softmax(att, axis=-1)
    o = jnp.einsum("bhts,bhsd->bhtd", att, v)
    o = o.transpose(0, 2, 1, 3).reshape(B, T, C)
    y = o + x
    mean = jnp.mean(y, axis=-1, keepdims=True)
    var = jnp.mean((y - mean) ** 2, axis=-1, keepdims=True)
    return (y - mean) / jnp.sqrt(var + eps) * gamma


if __name__ == "__main__":
    # Small config consistent with the module: B=2, T=8, C=32, heads=4
    B, T, C, H = 2, 8, 32, 4

    key = jax.random.PRNGKey(0)
    kx, kw, kg = jax.random.split(key, 3)

    x = jax.random.normal(kx, (B, T, C), dtype=jnp.float32)
    wqkv = jax.random.uniform(kw, (C, 3 * C), dtype=jnp.float32,
                              minval=-1.0 / math.sqrt(C), maxval=1.0 / math.sqrt(C))
    gamma = 1.0 + 0.1 * jax.random.normal(kg, (C,), dtype=jnp.float32)

    out = multi_head_attention(x, wqkv, gamma, n_heads=H)
    out = jax.block_until_ready(out)

    ref = _reference(x, wqkv, gamma, H)
    assert out.shape == (B, T, C)
    max_err = float(jnp.max(jnp.abs(out - ref)))
    assert jnp.allclose(out, ref, atol=2e-3, rtol=2e-3), f"mismatch vs reference (max_err={max_err})"

    print("KERNEL_OK")
</pallas_src>

<mosaic_0001>
module attributes {stable_mosaic.version = 11 : i64} {
  func.func @_fused_mha_ln_kernel(%arg0: i32, %arg1: i32, %arg2: memref<1x8x32xf32, #tpu.memory_space<vmem>>, %arg3: memref<32x32xf32, #tpu.memory_space<vmem>>, %arg4: memref<32x32xf32, #tpu.memory_space<vmem>>, %arg5: memref<32x32xf32, #tpu.memory_space<vmem>>, %arg6: memref<1x32xf32, #tpu.memory_space<vmem>>, %arg7: memref<1x8x32xf32, #tpu.memory_space<vmem>>, %arg8: memref<8x32xf32, #tpu.memory_space<vmem>>, %arg9: memref<8x32xf32, #tpu.memory_space<vmem>>, %arg10: memref<8x32xf32, #tpu.memory_space<vmem>>) attributes {dimension_semantics = [#tpu.dimension_semantics<parallel>, #tpu.dimension_semantics<arbitrary>], iteration_bounds = array<i64: 2, 1>, scalar_prefetch = 0 : i64, scratch_operands = 3 : i64, tpu.core_type = #tpu.core_type<tc>, window_params = [{transform_indices = @transform_0, window_bounds = array<i64: 1, 8, 32>}, {pipeline_mode = #tpu.pipeline_mode<synchronous>, transform_indices = @transform_1, window_bounds = array<i64: 32, 32>}, {pipeline_mode = #tpu.pipeline_mode<synchronous>, transform_indices = @transform_2, window_bounds = array<i64: 32, 32>}, {pipeline_mode = #tpu.pipeline_mode<synchronous>, transform_indices = @transform_3, window_bounds = array<i64: 32, 32>}, {pipeline_mode = #tpu.pipeline_mode<synchronous>, transform_indices = @transform_4, window_bounds = array<i64: 1, 32>}, {transform_indices = @transform_5, window_bounds = array<i64: 1, 8, 32>}]} {
    %c0_i32 = arith.constant 0 : i32
    %0 = arith.cmpi eq, %arg1, %c0_i32 : i32
    %1 = arith.extui %0 : i1 to i32
    %c0_i32_0 = arith.constant 0 : i32
    %2 = arith.cmpi ne, %1, %c0_i32_0 : i32
    scf.if %2 {
      %c0_53 = arith.constant 0 : index
      %c0_54 = arith.constant 0 : index
      %c0_55 = arith.constant 0 : index
      %102 = vector.load %arg2[%c0_53, %c0_54, %c0_55] : memref<1x8x32xf32, #tpu.memory_space<vmem>>, vector<1x8x32xf32>
      %103 = vector.shape_cast %102 : vector<1x8x32xf32> to vector<8x32xf32>
      %c0_56 = arith.constant 0 : index
      %c0_57 = arith.constant 0 : index
      %104 = vector.load %arg4[%c0_56, %c0_57] : memref<32x32xf32, #tpu.memory_space<vmem>>, vector<32x32xf32>
      %cst_58 = arith.constant dense<0.000000e+00> : vector<8x32xf32>
      %105 = tpu.matmul %103, %104, %cst_58 {dimension_numbers = #tpu.dot_dimension_numbers<[1], [0], [0], [1], [0, 0, 1, 1], [], []>} : vector<8x32xf32>, vector<32x32xf32>, vector<8x32xf32> -> vector<8x32xf32>
      %c0_59 = arith.constant 0 : index
      %c0_60 = arith.constant 0 : index
      %106 = vector.load %arg8[%c0_59, %c0_60] : memref<8x32xf32, #tpu.memory_space<vmem>>, vector<8x32xf32>
      tpu.vector_store %arg8[%c0_59, %c0_60], %105 {strides = array<i32>} : memref<8x32xf32, #tpu.memory_space<vmem>>, vector<8x32xf32>,
      %c0_61 = arith.constant 0 : index
      %c0_62 = arith.constant 0 : index
      %107 = vector.load %arg5[%c0_61, %c0_62] : memref<32x32xf32, #tpu.memory_space<vmem>>, vector<32x32xf32>
      %cst_63 = arith.constant dense<0.000000e+00> : vector<8x32xf32>
      %108 = tpu.matmul %103, %107, %cst_63 {dimension_numbers = #tpu.dot_dimension_numbers<[1], [0], [0], [1], [0, 0, 1, 1], [], []>} : vector<8x32xf32>, vector<32x32xf32>, vector<8x32xf32> -> vector<8x32xf32>
      %c0_64 = arith.constant 0 : index
      %c0_65 = arith.constant 0 : index
      %109 = vector.load %arg9[%c0_64, %c0_65] : memref<8x32xf32, #tpu.memory_space<vmem>>, vector<8x32xf32>
      tpu.vector_store %arg9[%c0_64, %c0_65], %108 {strides = array<i32>} : memref<8x32xf32, #tpu.memory_space<vmem>>, vector<8x32xf32>,
    } else {
    }
    %c8_i32 = arith.constant 8 : i32
    %3 = arith.muli %arg1, %c8_i32 : i32
    %4 = tpu.assume_multiple %3, 8 : i32
    %c0 = arith.constant 0 : index
    %5 = arith.index_cast %4 : i32 to index
    %c0_1 = arith.constant 0 : index
    %6 = vector.load %arg2[%c0, %5, %c0_1] : memref<1x8x32xf32, #tpu.memory_space<vmem>>, vector<1x8x32xf32>
    %7 = vector.shape_cast %6 : vector<1x8x32xf32> to vector<8x32xf32>
    %c0_2 = arith.constant 0 : index
    %c0_3 = arith.constant 0 : index
    %8 = vector.load %arg3[%c0_2, %c0_3] : memref<32x32xf32, #tpu.memory_space<vmem>>, vector<32x32xf32>
    %cst = arith.constant dense<0.000000e+00> : vector<8x32xf32>
    %9 = tpu.matmul %7, %8, %cst {dimension_numbers = #tpu.dot_dimension_numbers<[1], [0], [0], [1], [0, 0, 1, 1], [], []>} : vector<8x32xf32>, vector<32x32xf32>, vector<8x32xf32> -> vector<8x32xf32>
    %10 = vector.extract_strided_slice %9 {offsets = [0, 0], sizes = [8, 8], strides = [1, 1]} : vector<8x32xf32> to vector<8x8xf32>
    %c0_4 = arith.constant 0 : index
    %c0_5 = arith.constant 0 : index
    %11 = vector.load %arg8[%c0_4, %c0_5] : memref<8x32xf32, #tpu.memory_space<vmem>>, vector<8x8xf32>
    %c0_6 = arith.constant 0 : index
    %c0_7 = arith.constant 0 : index
    %12 = vector.load %arg9[%c0_6, %c0_7] : memref<8x32xf32, #tpu.memory_space<vmem>>, vector<8x8xf32>
    %13 = tpu.transpose %11, [1, 0] : vector<8x8xf32> -> vector<8x8xf32>
    %cst_8 = arith.constant dense<0.000000e+00> : vector<8x8xf32>
    %14 = tpu.matmul %10, %13, %cst_8 {dimension_numbers = #tpu.dot_dimension_numbers<[1], [0], [0], [1], [0, 0, 1, 1], [], []>} : vector<8x8xf32>, vector<8x8xf32>, vector<8x8xf32> -> vector<8x8xf32>
    %cst_9 = arith.constant dense<0xFF800000> : vector<8xf32>
    %15 = vector.multi_reduction <maximumf>, %14, %cst_9 [1] : vector<8x8xf32> to vector<8xf32>
    %16 = vector.shape_cast %15 : vector<8xf32> to vector<8x1xf32>
    %17 = vector.broadcast %16 : vector<8x1xf32> to vector<8x8xf32>
    %18 = arith.subf %14, %17 : vector<8x8xf32>
    %19 = math.exp %18 : vector<8x8xf32>
    %cst_10 = arith.constant dense<0.000000e+00> : vector<8xf32>
    %20 = vector.multi_reduction <add>, %19, %cst_10 [1] : vector<8x8xf32> to vector<8xf32>
    %21 = vector.shape_cast %20 : vector<8xf32> to vector<8x1xf32>
    %cst_11 = arith.constant dense<0.000000e+00> : vector<8x8xf32>
    %22 = tpu.matmul %19, %12, %cst_11 {dimension_numbers = #tpu.dot_dimension_numbers<[1], [0], [0], [1], [0, 0, 1, 1], [], []>} : vector<8x8xf32>, vector<8x8xf32>, vector<8x8xf32> -> vector<8x8xf32>
    %23 = tpu.reciprocal %21 : vector<8x1xf32> -> vector<8x1xf32>
    %24 = vector.broadcast %23 : vector<8x1xf32> to vector<8x8xf32>
    %25 = arith.mulf %22, %24 : vector<8x8xf32>
    %c0_12 = arith.constant 0 : index
    %c0_13 = arith.constant 0 : index
    %26 = vector.load %arg10[%c0_12, %c0_13] : memref<8x32xf32, #tpu.memory_space<vmem>>, vector<8x8xf32>
    tpu.vector_store %arg10[%c0_12, %c0_13], %25 {strides = array<i32>} : memref<8x32xf32, #tpu.memory_space<vmem>>, vector<8x8xf32>,
    %27 = vector.extract_strided_slice %9 {offsets = [0, 8], sizes = [8, 8], strides = [1, 1]} : vector<8x32xf32> to vector<8x8xf32>
    %c0_14 = arith.constant 0 : index
    %c8 = arith.constant 8 : index
    %28 = vector.load %arg8[%c0_14, %c8] : memref<8x32xf32, #tpu.memory_space<vmem>>, vector<8x8xf32>
    %c0_15 = arith.constant 0 : index
    %c8_16 = arith.constant 8 : index
    %29 = vector.load %arg9[%c0_15, %c8_16] : memref<8x32xf32, #tpu.memory_space<vmem>>, vector<8x8xf32>
    %30 = tpu.transpose %28, [1, 0] : vector<8x8xf32> -> vector<8x8xf32>
    %cst_17 = arith.constant dense<0.000000e+00> : vector<8x8xf32>
    %31 = tpu.matmul %27, %30, %cst_17 {dimension_numbers = #tpu.dot_dimension_numbers<[1], [0], [0], [1], [0, 0, 1, 1], [], []>} : vector<8x8xf32>, vector<8x8xf32>, vector<8x8xf32> -> vector<8x8xf32>
    %cst_18 = arith.constant dense<0xFF800000> : vector<8xf32>
    %32 = vector.multi_reduction <maximumf>, %31, %cst_18 [1] : vector<8x8xf32> to vector<8xf32>
    %33 = vector.shape_cast %32 : vector<8xf32> to vector<8x1xf32>
    %34 = vector.broadcast %33 : vector<8x1xf32> to vector<8x8xf32>
    %35 = arith.subf %31, %34 : vector<8x8xf32>
    %36 = math.exp %35 : vector<8x8xf32>
    %cst_19 = arith.constant dense<0.000000e+00> : vector<8xf32>
    %37 = vector.multi_reduction <add>, %36, %cst_19 [1] : vector<8x8xf32> to vector<8xf32>
    %38 = vector.shape_cast %37 : vector<8xf32> to vector<8x1xf32>
    %cst_20 = arith.constant dense<0.000000e+00> : vector<8x8xf32>
    %39 = tpu.matmul %36, %29, %cst_20 {dimension_numbers = #tpu.dot_dimension_numbers<[1], [0], [0], [1], [0, 0, 1, 1], [], []>} : vector<8x8xf32>, vector<8x8xf32>, vector<8x8xf32> -> vector<8x8xf32>
    %40 = tpu.reciprocal %38 : vector<8x1xf32> -> vector<8x1xf32>
    %41 = vector.broadcast %40 : vector<8x1xf32> to vector<8x8xf32>
    %42 = arith.mulf %39, %41 : vector<8x8xf32>
    %c0_21 = arith.constant 0 : index
    %c8_22 = arith.constant 8 : index
    %43 = vector.load %arg10[%c0_21, %c8_22] : memref<8x32xf32, #tpu.memory_space<vmem>>, vector<8x8xf32>
    tpu.vector_store %arg10[%c0_21, %c8_22], %42 {strides = array<i32>} : memref<8x32xf32, #tpu.memory_space<vmem>>, vector<8x8xf32>,
    %44 = vector.extract_strided_slice %9 {offsets = [0, 16], sizes = [8, 8], strides = [1, 1]} : vector<8x32xf32> to vector<8x8xf32>
    %c0_23 = arith.constant 0 : index
    %c16 = arith.constant 16 : index
    %45 = vector.load %arg8[%c0_23, %c16] : memref<8x32xf32, #tpu.memory_space<vmem>>, vector<8x8xf32>
    %c0_24 = arith.constant 0 : index
    %c16_25 = arith.constant 16 : index
    %46 = vector.load %arg9[%c0_24, %c16_25] : memref<8x32xf32, #tpu.memory_space<vmem>>, vector<8x8xf32>
    %47 = tpu.transpose %45, [1, 0] : vector<8x8xf32> -> vector<8x8xf32>
    %cst_26 = arith.constant dense<0.000000e+00> : vector<8x8xf32>
    %48 = tpu.matmul %44, %47, %cst_26 {dimension_numbers = #tpu.dot_dimension_numbers<[1], [0], [0], [1], [0, 0, 1, 1], [], []>} : vector<8x8xf32>, vector<8x8xf32>, vector<8x8xf32> -> vector<8x8xf32>
    %cst_27 = arith.constant dense<0xFF800000> : vector<8xf32>
    %49 = vector.multi_reduction <maximumf>, %48, %cst_27 [1] : vector<8x8xf32> to vector<8xf32>
    %50 = vector.shape_cast %49 : vector<8xf32> to vector<8x1xf32>
    %51 = vector.broadcast %50 : vector<8x1xf32> to vector<8x8xf32>
    %52 = arith.subf %48, %51 : vector<8x8xf32>
    %53 = math.exp %52 : vector<8x8xf32>
    %cst_28 = arith.constant dense<0.000000e+00> : vector<8xf32>
    %54 = vector.multi_reduction <add>, %53, %cst_28 [1] : vector<8x8xf32> to vector<8xf32>
    %55 = vector.shape_cast %54 : vector<8xf32> to vector<8x1xf32>
    %cst_29 = arith.constant dense<0.000000e+00> : vector<8x8xf32>
    %56 = tpu.matmul %53, %46, %cst_29 {dimension_numbers = #tpu.dot_dimension_numbers<[1], [0], [0], [1], [0, 0, 1, 1], [], []>} : vector<8x8xf32>, vector<8x8xf32>, vector<8x8xf32> -> vector<8x8xf32>
    %57 = tpu.reciprocal %55 : vector<8x1xf32> -> vector<8x1xf32>
    %58 = vector.broadcast %57 : vector<8x1xf32> to vector<8x8xf32>
    %59 = arith.mulf %56, %58 : vector<8x8xf32>
    %c0_30 = arith.constant 0 : index
    %c16_31 = arith.constant 16 : index
    %60 = vector.load %arg10[%c0_30, %c16_31] : memref<8x32xf32, #tpu.memory_space<vmem>>, vector<8x8xf32>
    tpu.vector_store %arg10[%c0_30, %c16_31], %59 {strides = array<i32>} : memref<8x32xf32, #tpu.memory_space<vmem>>, vector<8x8xf32>,
    %61 = vector.extract_strided_slice %9 {offsets = [0, 24], sizes = [8, 8], strides = [1, 1]} : vector<8x32xf32> to vector<8x8xf32>
    %c0_32 = arith.constant 0 : index
    %c24 = arith.constant 24 : index
    %62 = vector.load %arg8[%c0_32, %c24] : memref<8x32xf32, #tpu.memory_space<vmem>>, vector<8x8xf32>
    %c0_33 = arith.constant 0 : index
    %c24_34 = arith.constant 24 : index
    %63 = vector.load %arg9[%c0_33, %c24_34] : memref<8x32xf32, #tpu.memory_space<vmem>>, vector<8x8xf32>
    %64 = tpu.transpose %62, [1, 0] : vector<8x8xf32> -> vector<8x8xf32>
    %cst_35 = arith.constant dense<0.000000e+00> : vector<8x8xf32>
    %65 = tpu.matmul %61, %64, %cst_35 {dimension_numbers = #tpu.dot_dimension_numbers<[1], [0], [0], [1], [0, 0, 1, 1], [], []>} : vector<8x8xf32>, vector<8x8xf32>, vector<8x8xf32> -> vector<8x8xf32>
    %cst_36 = arith.constant dense<0xFF800000> : vector<8xf32>
    %66 = vector.multi_reduction <maximumf>, %65, %cst_36 [1] : vector<8x8xf32> to vector<8xf32>
    %67 = vector.shape_cast %66 : vector<8xf32> to vector<8x1xf32>
    %68 = vector.broadcast %67 : vector<8x1xf32> to vector<8x8xf32>
    %69 = arith.subf %65, %68 : vector<8x8xf32>
    %70 = math.exp %69 : vector<8x8xf32>
    %cst_37 = arith.constant dense<0.000000e+00> : vector<8xf32>
    %71 = vector.multi_reduction <add>, %70, %cst_37 [1] : vector<8x8xf32> to vector<8xf32>
    %72 = vector.shape_cast %71 : vector<8xf32> to vector<8x1xf32>
    %cst_38 = arith.constant dense<0.000000e+00> : vector<8x8xf32>
    %73 = tpu.matmul %70, %63, %cst_38 {dimension_numbers = #tpu.dot_dimension_numbers<[1], [0], [0], [1], [0, 0, 1, 1], [], []>} : vector<8x8xf32>, vector<8x8xf32>, vector<8x8xf32> -> vector<8x8xf32>
    %74 = tpu.reciprocal %72 : vector<8x1xf32> -> vector<8x1xf32>
    %75 = vector.broadcast %74 : vector<8x1xf32> to vector<8x8xf32>
    %76 = arith.mulf %73, %75 : vector<8x8xf32>
    %c0_39 = arith.constant 0 : index
    %c24_40 = arith.constant 24 : index
    %77 = vector.load %arg10[%c0_39, %c24_40] : memref<8x32xf32, #tpu.memory_space<vmem>>, vector<8x8xf32>
    tpu.vector_store %arg10[%c0_39, %c24_40], %76 {strides = array<i32>} : memref<8x32xf32, #tpu.memory_space<vmem>>, vector<8x8xf32>,
    %c0_41 = arith.constant 0 : index
    %c0_42 = arith.constant 0 : index
    %78 = vector.load %arg10[%c0_41, %c0_42] : memref<8x32xf32, #tpu.memory_space<vmem>>, vector<8x32xf32>
    %79 = arith.addf %78, %7 : vector<8x32xf32>
    %cst_43 = arith.constant dense<0.000000e+00> : vector<8xf32>
    %80 = vector.multi_reduction <add>, %79, %cst_43 [1] : vector<8x32xf32> to vector<8xf32>
    %81 = vector.shape_cast %80 : vector<8xf32> to vector<8x1xf32>
    %cst_44 = arith.constant 3.200000e+01 : f32
    %82 = vector.broadcast %cst_44 : f32 to vector<8x1xf32>
    %83 = arith.divf %81, %82 : vector<8x1xf32>
    %84 = vector.broadcast %83 : vector<8x1xf32> to vector<8x32xf32>
    %85 = arith.subf %79, %84 : vector<8x32xf32>
    %86 = arith.mulf %85, %85 : vector<8x32xf32>
    %cst_45 = arith.constant dense<0.000000e+00> : vector<8xf32>
    %87 = vector.multi_reduction <add>, %86, %cst_45 [1] : vector<8x32xf32> to vector<8xf32>
    %88 = vector.shape_cast %87 : vector<8xf32> to vector<8x1xf32>
    %cst_46 = arith.constant 3.200000e+01 : f32
    %89 = vector.broadcast %cst_46 : f32 to vector<8x1xf32>
    %90 = arith.divf %88, %89 : vector<8x1xf32>
    %cst_47 = arith.constant 9.99999974E-6 : f32
    %91 = vector.broadcast %cst_47 : f32 to vector<8x1xf32>
    %92 = arith.addf %90, %91 : vector<8x1xf32>
    %93 = math.rsqrt %92 : vector<8x1xf32>
    %94 = vector.broadcast %93 : vector<8x1xf32> to vector<8x32xf32>
    %95 = arith.mulf %85, %94 : vector<8x32xf32>
    %c0_48 = arith.constant 0 : index
    %c0_49 = arith.constant 0 : index
    %96 = vector.load %arg6[%c0_48, %c0_49] : memref<1x32xf32, #tpu.memory_space<vmem>>, vector<1x32xf32>
    %97 = vector.broadcast %96 : vector<1x32xf32> to vector<8x32xf32>
    %98 = arith.mulf %95, %97 : vector<8x32xf32>
    %c0_50 = arith.constant 0 : index
    %c0_51 = arith.constant 0 : index
    %c0_52 = arith.constant 0 : index
    %99 = vector.load %arg7[%c0_50, %c0_51, %c0_52] : memref<1x8x32xf32, #tpu.memory_space<vmem>>, vector<1x8x32xf32>
    %100 = vector.shape_cast %99 : vector<1x8x32xf32> to vector<8x32xf32>
    %101 = vector.shape_cast %98 : vector<8x32xf32> to vector<1x8x32xf32>
    tpu.vector_store %arg7[%c0_50, %c0_51, %c0_52], %101 {strides = array<i32>} : memref<1x8x32xf32, #tpu.memory_space<vmem>>, vector<1x8x32xf32>,
    return
  }
  func.func @transform_0(%arg0: i32, %arg1: i32) -> (i32, i32, i32) {
    %c0_i32 = arith.constant 0 : i32
    %c0_i32_0 = arith.constant 0 : i32
    %c0_i32_1 = arith.constant 0 : i32
    return %arg0, %c0_i32, %c0_i32_0 : i32, i32, i32
  }
  func.func @transform_1(%arg0: i32, %arg1: i32) -> (i32, i32) {
    %c0_i32 = arith.constant 0 : i32
    %c0_i32_0 = arith.constant 0 : i32
    %c0_i32_1 = arith.constant 0 : i32
    return %c0_i32, %c0_i32_0 : i32, i32
  }
  func.func @transform_2(%arg0: i32, %arg1: i32) -> (i32, i32) {
    %c0_i32 = arith.constant 0 : i32
    %c0_i32_0 = arith.constant 0 : i32
    %c0_i32_1 = arith.constant 0 : i32
    return %c0_i32, %c0_i32_0 : i32, i32
  }
  func.func @transform_3(%arg0: i32, %arg1: i32) -> (i32, i32) {
    %c0_i32 = arith.constant 0 : i32
    %c0_i32_0 = arith.constant 0 : i32
    %c0_i32_1 = arith.constant 0 : i32
    return %c0_i32, %c0_i32_0 : i32, i32
  }
  func.func @transform_4(%arg0: i32, %arg1: i32) -> (i32, i32) {
    %c0_i32 = arith.constant 0 : i32
    %c0_i32_0 = arith.constant 0 : i32
    %c0_i32_1 = arith.constant 0 : i32
    return %c0_i32, %c0_i32_0 : i32, i32
  }
  func.func @transform_5(%arg0: i32, %arg1: i32) -> (i32, i32, i32) {
    %c0_i32 = arith.constant 0 : i32
    %c0_i32_0 = arith.constant 0 : i32
    return %arg0, %arg1, %c0_i32 : i32, i32, i32
  }
}

</mosaic_0001>

<llo_original>
// kernel: tpu_custom_call.1
$region0: #{tpu_custom_call.1}
  #allocation0 [shape = 'u32[]', space=smem, size = 0x4, offset = 0x4, fixed_abs, tag = 'smem constant byte address 0x4 - core index']
  #allocation1 [shape = 'u32[72,128]{1,0:T(1,128)}', space=vmem, size = 0x9000, scoped, tag = 'internal scratch']
  #allocation2 [shape = 'f32[8,32]{1,0:T(8,128)}', space=vmem, size = 0x1000, scoped, tag = 'scratch operand']
  #allocation3 [shape = 'f32[8,32]{1,0:T(8,128)}', space=vmem, size = 0x1000, scoped, tag = 'scratch operand']
  #allocation4 [shape = 'f32[8,32]{1,0:T(8,128)}', space=vmem, size = 0x1000, scoped, tag = 'scratch operand']
  %s0 = inlined_call_operand.hbm [shape: f32[2,8,32], index: 0, kind: input, shape index: {}]
  %s1 = inlined_call_operand.hbm [shape: f32[32,32], index: 1, kind: input, shape index: {}]
  %s2 = inlined_call_operand.hbm [shape: f32[32,32], index: 2, kind: input, shape index: {}]
  %s3 = inlined_call_operand.hbm [shape: f32[32,32], index: 3, kind: input, shape index: {}]
  %s4 = inlined_call_operand.vmem [shape: f32[1,32], index: 4, kind: input, shape index: {}]
  %s5 = inlined_call_operand.hbm [shape: f32[2,8,32], index: 5, kind: output, shape index: {}]
  %s6 = sld [smem:[#allocation0]]
  $region73: #{tpu_custom_call.1} parent=0
    _
  %s8 = ssub.s32 1, %s6
  %s9 = scalar_select 0, %s8, %s6
  $region1: #{tpu_custom_call.1} parent=0
    #allocation5 [shape = 'u8[8192]{0}', space=vmem, size = 0x2000, scoped, tag = 'input window, operand 0']
    #allocation6 [shape = 's32[2]{0}', space=sflag, size = 0x8, scoped, tag = 'scoped memory for tpu_custom_call.1']
    #allocation7 [shape = 's32[2]{0}', space=sflag, size = 0x8, scoped, tag = 'scoped memory for tpu_custom_call.1']
    #allocation8 [shape = 'u8[16384]{0}', space=vmem, size = 0x4000, scoped, tag = 'input window, operand 1, single buffered']
    #allocation9 [shape = 's32[1]{0}', space=sflag, size = 0x4, scoped, tag = 'scoped memory for tpu_custom_call.1']
    #allocation10 [shape = 'u8[16384]{0}', space=vmem, size = 0x4000, scoped, tag = 'input window, operand 2, single buffered']
    #allocation11 [shape = 'u8[16384]{0}', space=vmem, size = 0x4000, scoped, tag = 'input window, operand 3, single buffered']
    #allocation12 [shape = 's32[1]{0}', space=sflag, size = 0x4, scoped, tag = 'scoped memory for tpu_custom_call.1']
    #allocation13 [shape = 'u8[8192]{0}', space=vmem, size = 0x2000, scoped, tag = 'output window, operand 0']
    %10 = vsyncpa [#allocation6], 0
    %s11 = scalar_lea.sflag [#allocation6], 1
    %12 = vsyncpa %s11, 0
    %13 = vsyncpa [#allocation9], 0
    %14 = vsyncpa [#allocation12], 0
    %15 = vsyncpa [#allocation7], 0
    %s16 = scalar_lea.sflag [#allocation7], 1
    %17 = vsyncpa %s16, 0
    loop: start=0, step=1, limit=4
    $region2: #{tpu_custom_call.1} parent=1 // loop_pre_header
      _
    $region3: #{tpu_custom_call.1} parent=1 // loop_header
      %s19 = sphi 0, %s23
      %p20 = scmp.ge.s32.totalorder %s19, 4
      %s26 = sphi 0, %s38
      %s27 = sphi 0, %s34
      %s28 = sphi 0, %s26
      %s29 = sphi 0, %s27
      %s30 = sphi 0, %s28
      %s31 = sphi 0, %s29
      %s41 = sphi 0, %s43
      %s44 = sphi 0, %s41
      %s45 = sphi 0, %s44
      %s61 = sphi 0, %s45
      %s65 = sphi 0, %s65
      %s67 = sphi 0, %s65
      %s68 = sphi 0, %s67
      %s82 = sphi 0, %s68
      %s86 = sphi 0, %s86
      %s88 = sphi 0, %s86
      %s89 = sphi 0, %s88
      %s103 = sphi 0, %s89
      %s107 = sphi 0, %s107
      %s109 = sphi 0, %s107
      %s110 = sphi 0, %s109
      %s124 = sphi 0, %s110
      %s128 = sphi 0, %s128
      %s130 = sphi 0, %s128
      %s131 = sphi 0, %s130
      %s145 = sphi 0, %s131
      %s153 = sphi 0, %s155
      %s156 = sphi 0, %s153
      %s157 = sphi 0, %s156
      %s173 = sphi 0, %s157
    $region4: #{tpu_custom_call.1} parent=1 // loop_header_branch
      %22 = sbr.rel (%p20) target = $region8
    $region5: #{tpu_custom_call.1} parent=1 // loop_body
      %s24 = ssub.s32 %s19, 1
      %s25 = ssub.s32 %s19, 2
      %s32 = sadd.s32 1, %s27
      %p33 = scmp.ge.s32.totalorder %s32, 1
      %s34 = scalar_select %p33, 0, %s32
      %s35 = sadd.s32 1, %s26
      %s36 = scalar_select %p33, %s35, %s26
      %p37 = scmp.ge.s32.totalorder %s36, 2
      %s38 = scalar_select %p37, 0, %s36
      %s39 = ssub.s32 %s26, %s38
      %p40 = scmp.eq.s32.totalorder %s39, 0
      %s42 = sadd.s32 %s41, 1
      %s43 = scalar_select %p40, %s41, %s42
      %p46 = pneg %p40
      %p47 = scmp.eq.s32.totalorder %s19, 1
      %p48 = por %p46, %p47
      %p49 = scmp.ne.s32.totalorder %s41, %s44
      %p50 = scmp.eq.s32.totalorder %s19, 0
      %p51 = por %p49, %p50
      %p52 = scmp.ne.s32.totalorder %s41, %s44
      %p53 = scmp.eq.s32.totalorder %s24, 1
      %p54 = por %p52, %p53
      %p55 = scmp.ne.s32.totalorder %s44, %s45
      %p56 = scmp.eq.s32.totalorder %s24, 0
      %p57 = por %p55, %p56
      %p58 = scmp.ne.s32.totalorder %s44, %s45
      %p59 = scmp.eq.s32.totalorder %s25, 1
      %p60 = por %p58, %p59
      %p62 = scmp.ne.s32.totalorder %s45, %s61
      %p63 = scmp.eq.s32.totalorder %s25, 0
      %p64 = por %p62, %p63
      %s66 = sadd.s32 %s65, 1
      %p69 = scmp.eq.s32.totalorder %s19, 1
      %p70 = scmp.ne.s32.totalorder %s65, %s67
      %p71 = scmp.eq.s32.totalorder %s19, 0
      %p72 = por %p70, %p71
      %p73 = scmp.ne.s32.totalorder %s65, %s67
      %p74 = scmp.eq.s32.totalorder %s24, 1
      %p75 = por %p73, %p74
      %p76 = scmp.ne.s32.totalorder %s67, %s68
      %p77 = scmp.eq.s32.totalorder %s24, 0
      %p78 = por %p76, %p77
      %p79 = scmp.ne.s32.totalorder %s67, %s68
      %p80 = scmp.eq.s32.totalorder %s25, 1
      %p81 = por %p79, %p80
      %p83 = scmp.ne.s32.totalorder %s68, %s82
      %p84 = scmp.eq.s32.totalorder %s25, 0
      %p85 = por %p83, %p84
      %s87 = sadd.s32 %s86, 1
      %p90 = scmp.eq.s32.totalorder %s19, 1
      %p91 = scmp.ne.s32.totalorder %s86, %s88
      %p92 = scmp.eq.s32.totalorder %s19, 0
      %p93 = por %p91, %p92
      %p94 = scmp.ne.s32.totalorder %s86, %s88
      %p95 = scmp.eq.s32.totalorder %s24, 1
      %p96 = por %p94, %p95
      %p97 = scmp.ne.s32.totalorder %s88, %s89
      %p98 = scmp.eq.s32.totalorder %s24, 0
      %p99 = por %p97, %p98
      %p100 = scmp.ne.s32.totalorder %s88, %s89
      %p101 = scmp.eq.s32.totalorder %s25, 1
      %p102 = por %p100, %p101
      %p104 = scmp.ne.s32.totalorder %s89, %s103
      %p105 = scmp.eq.s32.totalorder %s25, 0
      %p106 = por %p104, %p105
      %s108 = sadd.s32 %s107, 1
      %p111 = scmp.eq.s32.totalorder %s19, 1
      %p112 = scmp.ne.s32.totalorder %s107, %s109
      %p113 = scmp.eq.s32.totalorder %s19, 0
      %p114 = por %p112, %p113
      %p115 = scmp.ne.s32.totalorder %s107, %s109
      %p116 = scmp.eq.s32.totalorder %s24, 1
      %p117 = por %p115, %p116
      %p118 = scmp.ne.s32.totalorder %s109, %s110
      %p119 = scmp.eq.s32.totalorder %s24, 0
      %p120 = por %p118, %p119
      %p121 = scmp.ne.s32.totalorder %s109, %s110
      %p122 = scmp.eq.s32.totalorder %s25, 1
      %p123 = por %p121, %p122
      %p125 = scmp.ne.s32.totalorder %s110, %s124
      %p126 = scmp.eq.s32.totalorder %s25, 0
      %p127 = por %p125, %p126
      %s129 = sadd.s32 %s128, 1
      %p132 = scmp.eq.s32.totalorder %s19, 1
      %p133 = scmp.ne.s32.totalorder %s128, %s130
      %p134 = scmp.eq.s32.totalorder %s19, 0
      %p135 = por %p133, %p134
      %p136 = scmp.ne.s32.totalorder %s128, %s130
      %p137 = scmp.eq.s32.totalorder %s24, 1
      %p138 = por %p136, %p137
      %p139 = scmp.ne.s32.totalorder %s130, %s131
      %p140 = scmp.eq.s32.totalorder %s24, 0
      %p141 = por %p139, %p140
      %p142 = scmp.ne.s32.totalorder %s130, %s131
      %p143 = scmp.eq.s32.totalorder %s25, 1
      %p144 = por %p142, %p143
      %p146 = scmp.ne.s32.totalorder %s131, %s145
      %p147 = scmp.eq.s32.totalorder %s25, 0
      %p148 = por %p146, %p147
      %s149 = ssub.s32 %s26, %s38
      %s150 = ssub.s32 %s27, %s34
      %s151 = sor.u32 %s149, %s150
      %p152 = scmp.eq.s32.totalorder %s151, 0
      %s154 = sadd.s32 %s153, 1
      %s155 = scalar_select %p152, %s153, %s154
      %p158 = pneg %p152
      %p159 = scmp.eq.s32.totalorder %s19, 1
      %p160 = por %p158, %p159
      %p161 = scmp.ne.s32.totalorder %s153, %s156
      %p162 = scmp.eq.s32.totalorder %s19, 0
      %p163 = por %p161, %p162
      %p164 = scmp.ne.s32.totalorder %s153, %s156
      %p165 = scmp.eq.s32.totalorder %s24, 1
      %p166 = por %p164, %p165
      %p167 = scmp.ne.s32.totalorder %s156, %s157
      %p168 = scmp.eq.s32.totalorder %s24, 0
      %p169 = por %p167, %p168
      %p170 = scmp.ne.s32.totalorder %s156, %s157
      %p171 = scmp.eq.s32.totalorder %s25, 1
      %p172 = por %p170, %p171
      %p174 = scmp.ne.s32.totalorder %s157, %s173
      %p175 = scmp.eq.s32.totalorder %s25, 0
      %p176 = por %p174, %p175
      %p177 = scmp.le.s32.totalorder 1, %s19
      %p178 = scmp.lt.s32.totalorder %s19, 3
      %p179 = pnand %p177, %p178
      %p180 = pneg %p179
      // Predicated region
      $region9: #{tpu_custom_call.1} parent=5 // pred_check
        _
      $region10: #{tpu_custom_call.1} parent=5 // pred_check_branch
        %182 = sbr.rel (%p179) target = $region12
      $region11: #{tpu_custom_call.1} parent=5 // pred_region
        %s183 = ssub.s32 %s19, 1
        // Predicated region
        $region13: #{tpu_custom_call.1} parent=11 // pred_check
          %p184 = pneg %p78
        $region14: #{tpu_custom_call.1} parent=11 // pred_check_branch
          %186 = sbr.rel (%p184) target = $region16
        $region15: #{tpu_custom_call.1} parent=11 // pred_region
          %188 = vsyncadd [#allocation9], 0
          %s189 = sshll.u32 %s1, 4
          %s190 = int_to_ptr.hbm [resolvable:$true] %s189
          %s191 = sshll.u32 [#allocation8], 4
          %s192 = int_to_ptr.vmem [resolvable:$true] %s191
          %197 = dma.hbm_to_vmem [thread:$0]  %s190, 512, %s192, [#allocation9], 128, 128, 8
        $region16: #{tpu_custom_call.1} parent=11 // pred_fallthru
          _
        // Predicated region
        $region17: #{tpu_custom_call.1} parent=11 // pred_check
          %p198 = pneg %p99
        $region18: #{tpu_custom_call.1} parent=11 // pred_check_branch
          %200 = sbr.rel (%p198) target = $region20
        $region19: #{tpu_custom_call.1} parent=11 // pred_region
          %202 = vsyncadd [#allocation9], 0
          %s203 = sshll.u32 %s2, 4
          %s204 = int_to_ptr.hbm [resolvable:$true] %s203
          %s205 = sshll.u32 [#allocation10], 4
          %s206 = int_to_ptr.vmem [resolvable:$true] %s205
          %211 = dma.hbm_to_vmem [thread:$0]  %s204, 512, %s206, [#allocation9], 128, 128, 8
        $region20: #{tpu_custom_call.1} parent=11 // pred_fallthru
          _
        // Predicated region
        $region21: #{tpu_custom_call.1} parent=11 // pred_check
          %p212 = pneg %p120
        $region22: #{tpu_custom_call.1} parent=11 // pred_check_branch
          %214 = sbr.rel (%p212) target = $region24
        $region23: #{tpu_custom_call.1} parent=11 // pred_region
          %216 = vsyncadd [#allocation12], 0
          %s217 = sshll.u32 %s3, 4
          %s218 = int_to_ptr.hbm [resolvable:$true] %s217
          %s219 = sshll.u32 [#allocation11], 4
          %s220 = int_to_ptr.vmem [resolvable:$true] %s219
          %225 = dma.hbm_to_vmem [thread:$0]  %s218, 512, %s220, [#allocation12], 128, 128, 8
        $region24: #{tpu_custom_call.1} parent=11 // pred_fallthru
          _
        // Predicated region
        $region25: #{tpu_custom_call.1} parent=11 // pred_check
          %p226 = pneg %p141
        $region26: #{tpu_custom_call.1} parent=11 // pred_check_branch
          %228 = sbr.rel (%p226) target = $region28
        $region27: #{tpu_custom_call.1} parent=11 // pred_region
          _
        $region28: #{tpu_custom_call.1} parent=11 // pred_fallthru
          _
      $region12: #{tpu_custom_call.1} parent=5 // pred_fallthru
        _
      %p229 = scmp.lt.s32.totalorder %s19, 2
      // Predicated region
      $region29: #{tpu_custom_call.1} parent=5 // pred_check
        %p230 = pneg %p229
      $region30: #{tpu_custom_call.1} parent=5 // pred_check_branch
        %232 = sbr.rel (%p230) target = $region32
      $region31: #{tpu_custom_call.1} parent=5 // pred_region
        // Predicated region
        $region33: #{tpu_custom_call.1} parent=31 // pred_check
          %p233 = pneg %p51
        $region34: #{tpu_custom_call.1} parent=31 // pred_check_branch
          %235 = sbr.rel (%p233) target = $region36
        $region35: #{tpu_custom_call.1} parent=31 // pred_region
          %s236 = sand.u32 %s41, 1
          %s237 = scalar_lea.sflag [#allocation6], %s236
          %s238 = sand.u32 %s41, 1
          %s239 = smul.addr %s238, 8
          %s240 = scalar_lea.vmem [#allocation5], %s239
          %242 = vsyncadd %s237, 0
          %s243 = smul.addr %s26, 8
          %s244 = scalar_lea.hbm %s0, %s243
          %s246 = sshll.u32 %s244, 4
          %s247 = int_to_ptr.hbm [resolvable:$true] %s246
          %s248 = sshll.u32 %s240, 4
          %s249 = int_to_ptr.vmem [resolvable:$true] %s248
          %251 = dma.hbm_to_vmem [thread:$0]  %s247, 128, %s249, %s237
        $region36: #{tpu_custom_call.1} parent=31 // pred_fallthru
          _
      $region32: #{tpu_custom_call.1} parent=5 // pred_fallthru
        _
      %p252 = scmp.le.s32.totalorder 1, %s19
      %p253 = scmp.lt.s32.totalorder %s19, 3
      %p254 = pnand %p252, %p253
      %p255 = pneg %p254
      // Predicated region
      $region37: #{tpu_custom_call.1} parent=5 // pred_check
        _
      $region38: #{tpu_custom_call.1} parent=5 // pred_check_branch
        %257 = sbr.rel (%p254) target = $region40
      $region39: #{tpu_custom_call.1} parent=5 // pred_region
        %s258 = ssub.s32 %s19, 1
        %s259 = sand.u32 %s44, 1
        %s260 = scalar_lea.sflag [#allocation6], %s259
        %s261 = sand.u32 %s44, 1
        %s262 = smul.addr %s261, 8
        %s263 = scalar_lea.vmem [#allocation5], %s262
        // Predicated region
        $region41: #{tpu_custom_call.1} parent=39 // pred_check
          %p264 = pneg %p57
        $region42: #{tpu_custom_call.1} parent=39 // pred_check_branch
          %266 = sbr.rel (%p264) target = $region44
        $region43: #{tpu_custom_call.1} parent=39 // pred_region
          %268 = dma.done %s260, 128
        $region44: #{tpu_custom_call.1} parent=39 // pred_fallthru
          _
        // Predicated region
        $region45: #{tpu_custom_call.1} parent=39 // pred_check
          %p269 = pneg %p78
        $region46: #{tpu_custom_call.1} parent=39 // pred_check_branch
          %271 = sbr.rel (%p269) target = $region48
        $region47: #{tpu_custom_call.1} parent=39 // pred_region
          %273 = dma.done [#allocation9], 512
        $region48: #{tpu_custom_call.1} parent=39 // pred_fallthru
          _
        // Predicated region
        $region49: #{tpu_custom_call.1} parent=39 // pred_check
          %p274 = pneg %p99
        $region50: #{tpu_custom_call.1} parent=39 // pred_check_branch
          %276 = sbr.rel (%p274) target = $region52
        $region51: #{tpu_custom_call.1} parent=39 // pred_region
          %278 = dma.done [#allocation9], 512
        $region52: #{tpu_custom_call.1} parent=39 // pred_fallthru
          _
        // Predicated region
        $region53: #{tpu_custom_call.1} parent=39 // pred_check
          %p279 = pneg %p120
        $region54: #{tpu_custom_call.1} parent=39 // pred_check_branch
          %281 = sbr.rel (%p279) target = $region56
        $region55: #{tpu_custom_call.1} parent=39 // pred_region
          %283 = dma.done [#allocation12], 512
        $region56: #{tpu_custom_call.1} parent=39 // pred_fallthru
          _
        %s284 = sand.u32 %s44, 1
        %s285 = scalar_lea.sflag [#allocation6], %s284
        %s286 = sand.u32 %s44, 1
        %s287 = smul.addr %s286, 8
        %s288 = scalar_lea.vmem [#allocation5], %s287
        %p289 = pneg %p57
        %p290 = pneg %p54
        %p291 = pneg %p78
        %p292 = pneg %p75
        %p293 = pneg %p99
        %p294 = pneg %p96
        %p295 = pneg %p120
        %p296 = pneg %p117
        %p297 = pneg %p141
        %p298 = pneg %p138
        %p299 = pneg %p169
        %p300 = pneg %p166
        %s301 = sand.u32 %s156, 1
        %s302 = scalar_lea.sflag [#allocation7], %s301
        %s303 = sand.u32 %s156, 1
        %s304 = smul.addr %s303, 8
        %s305 = scalar_lea.vmem [#allocation13], %s304
        %p306 = scmp.eq.s32.totalorder %s29, 0
        // Predicated region
        $region57: #{tpu_custom_call.1} parent=39 // pred_check
          %p307 = pneg %p306
        $region58: #{tpu_custom_call.1} parent=39 // pred_check_branch
          %309 = sbr.rel (%p307) target = $region60
        $region59: #{tpu_custom_call.1} parent=39 // pred_region
          %v310 = vld [vmem:[%s263] sm:$0xff]
          %v311 = vld [vmem:[#allocation10] sm:$0xff]
          %v312 = vld [vmem:[#allocation10 + $0x8] sm:$0xff]
          %v313 = vld [vmem:[#allocation10 + $0x10] sm:$0xff]
          %v314 = vld [vmem:[#allocation10 + $0x18] sm:$0xff]
          %vm315 = vcmask 261120
          %v317 = vsel %vm315, %v310, 0
          %319 = vmatpush.msra.mxu0 0.0
          %320 = vmatpush.msra.mxu0 0.0
          %321 = vmatpush.msra.mxu0 0.0
          %322 = vmatpush.msra.mxu0 0.0
          %323 = vmatpush.msra.mxu0 0.0
          %324 = vmatpush.msra.mxu0 0.0
          %325 = vmatpush.msra.mxu0 0.0
          %326 = vmatpush.msra.mxu0 0.0
          %327 = vmatpush.msra.mxu0 0.0
          %328 = vmatpush.msra.mxu0 0.0
          %329 = vmatpush.msra.mxu0 0.0
          %330 = vmatpush.msra.mxu0 0.0
          %331 = vmatpush.msra.mxu0 %v314
          %332 = vmatpush.msra.mxu0 %v313
          %333 = vmatpush.msra.mxu0 %v312
          %334 = vmatpush.msra.mxu0 %v311
          %335 = vmatmul.f32.gmra.mxu0 %v317
          %v336 = vpop.f32.mrf.mxu0
          %v337 = vadd.f32 0.0, %v336
          %338 = vdwg.mxu0
          %339 = vst.msk [vmem:[#allocation2] sm:$0xff] %vm315, %v337
          %v340 = vld [vmem:[#allocation11] sm:$0xff]
          %v341 = vld [vmem:[#allocation11 + $0x8] sm:$0xff]
          %v342 = vld [vmem:[#allocation11 + $0x10] sm:$0xff]
          %v343 = vld [vmem:[#allocation11 + $0x18] sm:$0xff]
          %344 = vmatpush.msra.mxu0 0.0
          %345 = vmatpush.msra.mxu0 0.0
          %346 = vmatpush.msra.mxu0 0.0
          %347 = vmatpush.msra.mxu0 0.0
          %348 = vmatpush.msra.mxu0 0.0
          %349 = vmatpush.msra.mxu0 0.0
          %350 = vmatpush.msra.mxu0 0.0
          %351 = vmatpush.msra.mxu0 0.0
          %352 = vmatpush.msra.mxu0 0.0
          %353 = vmatpush.msra.mxu0 0.0
          %354 = vmatpush.msra.mxu0 0.0
          %355 = vmatpush.msra.mxu0 0.0
          %356 = vmatpush.msra.mxu0 %v343
          %357 = vmatpush.msra.mxu0 %v342
          %358 = vmatpush.msra.mxu0 %v341
          %359 = vmatpush.msra.mxu0 %v340
          %360 = vmatmul.f32.gmra.mxu0 %v317
          %v361 = vpop.f32.mrf.mxu0
          %v362 = vadd.f32 0.0, %v361
          %363 = vdwg.mxu0
          %364 = vst.msk [vmem:[#allocation3] sm:$0xff] %vm315, %v362
        $region60: #{tpu_custom_call.1} parent=39 // pred_fallthru
          _
        %s365 = smul.u32 %s29, 8
        %s366 = scalar_lea.vmem %s263, %s365 [#allocation5]
        %v367 = vld [vmem:[%s366] sm:$0xff]
        %v368 = vld [vmem:[#allocation8] sm:$0xff]
        %v369 = vld [vmem:[#allocation8 + $0x8] sm:$0xff]
        %v370 = vld [vmem:[#allocation8 + $0x10] sm:$0xff]
        %v371 = vld [vmem:[#allocation8 + $0x18] sm:$0xff]
        %vm372 = vcmask 261120
        %v374 = vsel %vm372, %v367, 0
        %376 = vmatpush.msra.mxu0 0.0
        %377 = vmatpush.msra.mxu0 0.0
        %378 = vmatpush.msra.mxu0 0.0
        %379 = vmatpush.msra.mxu0 0.0
        %380 = vmatpush.msra.mxu0 0.0
        %381 = vmatpush.msra.mxu0 0.0
        %382 = vmatpush.msra.mxu0 0.0
        %383 = vmatpush.msra.mxu0 0.0
        %384 = vmatpush.msra.mxu0 0.0
        %385 = vmatpush.msra.mxu0 0.0
        %386 = vmatpush.msra.mxu0 0.0
        %387 = vmatpush.msra.mxu0 0.0
        %388 = vmatpush.msra.mxu0 %v371
        %389 = vmatpush.msra.mxu0 %v370
        %390 = vmatpush.msra.mxu0 %v369
        %391 = vmatpush.msra.mxu0 %v368
        %392 = vmatmul.f32.gmra.mxu0 %v374
        %v393 = vpop.f32.mrf.mxu0
        %v394 = vadd.f32 0.0, %v393
        %395 = vdwg.mxu0
        %v396 = vld [vmem:[#allocation2] sm:$0xff]
        %v397 = vld [vmem:[#allocation3] sm:$0xff]
        %vm398 = vcmask 64512
        %v400 = vsel %vm398, %v394, 0
        %v403 = vsel %vm398, %v396, 0
        %405 = vmatpush.xpose.msra.mxu0 0.0
        %406 = vmatpush.xpose.msra.mxu0 0.0
        %407 = vmatpush.xpose.msra.mxu0 0.0
        %408 = vmatpush.xpose.msra.mxu0 0.0
        %409 = vmatpush.xpose.msra.mxu0 0.0
        %410 = vmatpush.xpose.msra.mxu0 0.0
        %411 = vmatpush.xpose.msra.mxu0 0.0
        %412 = vmatpush.xpose.msra.mxu0 0.0
        %413 = vmatpush.xpose.msra.mxu0 0.0
        %414 = vmatpush.xpose.msra.mxu0 0.0
        %415 = vmatpush.xpose.msra.mxu0 0.0
        %416 = vmatpush.xpose.msra.mxu0 0.0
        %417 = vmatpush.xpose.msra.mxu0 0.0
        %418 = vmatpush.xpose.msra.mxu0 0.0
        %419 = vmatpush.xpose.msra.mxu0 0.0
        %420 = vmatpush.xpose.msra.mxu0 %v403
        %421 = vmatmul.f32.gmra.mxu0 %v400
        %v422 = vpop.f32.mrf.mxu0
        %v423 = vadd.f32 0.0, %v422
        %424 = vdwg.mxu0
        %v425 = vsel %vm398, %v423, -inf
        %426 = vmax.xlane.f32.xlu0 %v425
        %v427 = vpop.xlane.xlu0 %426
        %v428 = vsub.f32 %v423, %v427
        %v429 = vmul.f32 %v428, 1.442695
        %v430 = vpow.pop %v429
        %v431 = vsel %vm398, %v430, 0.0
        %432 = vadd.xlane.f32.xlu0 %v431
        %v433 = vpop.xlane.xlu0 %432
        %v435 = vsel %vm398, %v430, 0
        %437 = vmatpush.msra.mxu0 0.0
        %438 = vmatpush.msra.mxu0 0.0
        %439 = vmatpush.msra.mxu0 0.0
        %440 = vmatpush.msra.mxu0 0.0
        %441 = vmatpush.msra.mxu0 0.0
        %442 = vmatpush.msra.mxu0 0.0
        %443 = vmatpush.msra.mxu0 0.0
        %444 = vmatpush.msra.mxu0 0.0
        %445 = vmatpush.msra.mxu0 0.0
        %446 = vmatpush.msra.mxu0 0.0
        %447 = vmatpush.msra.mxu0 0.0
        %448 = vmatpush.msra.mxu0 0.0
        %449 = vmatpush.msra.mxu0 0.0
        %450 = vmatpush.msra.mxu0 0.0
        %451 = vmatpush.msra.mxu0 0.0
        %452 = vmatpush.msra.mxu0 %v397
        %453 = vmatmul.f32.gmra.mxu0 %v435
        %v454 = vpop.f32.mrf.mxu0
        %v455 = vadd.f32 0.0, %v454
        %456 = vdwg.mxu0
        %v457 = vrcp.pop %v433
        %v458 = vmul.f32 %v433, %v457
        %v459 = vsub.f32 1.0, %v458
        %v460 = vmul.f32 %v457, %v459
        %v461 = vadd.f32 %v457, %v460
        %vm462 = vweird.f32 %v433
        %vm463 = vweird.f32 %v457
        %vm464 = vmor %vm462, %vm463
        %v465 = vsel %vm464, %v457, %v461
        %v466 = vand.u32 2147483647, %v433
        %vm467 = vcmp.eq.f32.partialorder %v466, 8.507059e+37
        %v468 = vand.u32 %v433, 2147483648
        %v469 = vor.u32 1.1754944e-38, %v468
        %v470 = vsel %vm467, %v469, %v465
        %v471 = vmul.f32 %v455, %v470
        %472 = vst.msk [vmem:[#allocation4] sm:$0xff] %vm398, %v471
        %v473 = vld [vmem:[#allocation2] sm:$0xff]
        %v474 = vld [vmem:[#allocation3] sm:$0xff]
        %475 = vrot.lane.b32.xlu0 %v394, 120
        %v476 = vpop.permute.xlu0 %475
        %478 = vrot.lane.b32.xlu0 %v473, 120
        %v479 = vpop.permute.xlu0 %478
        %v480 = vsel %vm398, %v476, 0
        %v482 = vsel %vm398, %v479, 0
        %484 = vmatpush.xpose.msra.mxu0 0.0
        %485 = vmatpush.xpose.msra.mxu0 0.0
        %486 = vmatpush.xpose.msra.mxu0 0.0
        %487 = vmatpush.xpose.msra.mxu0 0.0
        %488 = vmatpush.xpose.msra.mxu0 0.0
        %489 = vmatpush.xpose.msra.mxu0 0.0
        %490 = vmatpush.xpose.msra.mxu0 0.0
        %491 = vmatpush.xpose.msra.mxu0 0.0
        %492 = vmatpush.xpose.msra.mxu0 0.0
        %493 = vmatpush.xpose.msra.mxu0 0.0
        %494 = vmatpush.xpose.msra.mxu0 0.0
        %495 = vmatpush.xpose.msra.mxu0 0.0
        %496 = vmatpush.xpose.msra.mxu0 0.0
        %497 = vmatpush.xpose.msra.mxu0 0.0
        %498 = vmatpush.xpose.msra.mxu0 0.0
        %499 = vmatpush.xpose.msra.mxu0 %v482
        %500 = vmatmul.f32.gmra.mxu0 %v480
        %v501 = vpop.f32.mrf.mxu0
        %v502 = vadd.f32 0.0, %v501
        %503 = vdwg.mxu0
        %v504 = vsel %vm398, %v502, -inf
        %505 = vmax.xlane.f32.xlu0 %v504
        %v506 = vpop.xlane.xlu0 %505
        %v507 = vsub.f32 %v502, %v506
        %v508 = vmul.f32 %v507, 1.442695
        %v509 = vpow.pop %v508
        %v510 = vsel %vm398, %v509, 0.0
        %511 = vadd.xlane.f32.xlu0 %v510
        %v512 = vpop.xlane.xlu0 %511
        %514 = vrot.lane.b32.xlu0 %v474, 120
        %v515 = vpop.permute.xlu0 %514
        %v518 = vsel %vm398, %v509, 0
        %520 = vmatpush.msra.mxu0 0.0
        %521 = vmatpush.msra.mxu0 0.0
        %522 = vmatpush.msra.mxu0 0.0
        %523 = vmatpush.msra.mxu0 0.0
        %524 = vmatpush.msra.mxu0 0.0
        %525 = vmatpush.msra.mxu0 0.0
        %526 = vmatpush.msra.mxu0 0.0
        %527 = vmatpush.msra.mxu0 0.0
        %528 = vmatpush.msra.mxu0 0.0
        %529 = vmatpush.msra.mxu0 0.0
        %530 = vmatpush.msra.mxu0 0.0
        %531 = vmatpush.msra.mxu0 0.0
        %532 = vmatpush.msra.mxu0 0.0
        %533 = vmatpush.msra.mxu0 0.0
        %534 = vmatpush.msra.mxu0 0.0
        %535 = vmatpush.msra.mxu0 %v515
        %536 = vmatmul.f32.gmra.mxu0 %v518
        %v537 = vpop.f32.mrf.mxu0
        %v538 = vadd.f32 0.0, %v537
        %539 = vdwg.mxu0
        %v540 = vrcp.pop %v512
        %v541 = vmul.f32 %v512, %v540
        %v542 = vsub.f32 1.0, %v541
        %v543 = vmul.f32 %v540, %v542
        %v544 = vadd.f32 %v540, %v543
        %vm545 = vweird.f32 %v512
        %vm546 = vweird.f32 %v540
        %vm547 = vmor %vm545, %vm546
        %v548 = vsel %vm547, %v540, %v544
        %v549 = vand.u32 2147483647, %v512
        %vm550 = vcmp.eq.f32.partialorder %v549, 8.507059e+37
        %v551 = vand.u32 %v512, 2147483648
        %v552 = vor.u32 1.1754944e-38, %v551
        %v553 = vsel %vm550, %v552, %v548
        %v554 = vmul.f32 %v538, %v553
        %556 = vrot.lane.b32.xlu0 %v554, 8
        %v557 = vpop.permute.xlu0 %556
        %vm559 = vcmask 130112
        %560 = vst.msk [vmem:[#allocation4] sm:$0xff] %vm559, %v557
        %v561 = vld [vmem:[#allocation2] sm:$0xff]
        %v562 = vld [vmem:[#allocation3] sm:$0xff]
        %563 = vrot.lane.b32.xlu0 %v394, 112
        %v564 = vpop.permute.xlu0 %563
        %566 = vrot.lane.b32.xlu0 %v561, 112
        %v567 = vpop.permute.xlu0 %566
        %v568 = vsel %vm398, %v564, 0
        %v570 = vsel %vm398, %v567, 0
        %572 = vmatpush.xpose.msra.mxu0 0.0
        %573 = vmatpush.xpose.msra.mxu0 0.0
        %574 = vmatpush.xpose.msra.mxu0 0.0
        %575 = vmatpush.xpose.msra.mxu0 0.0
        %576 = vmatpush.xpose.msra.mxu0 0.0
        %577 = vmatpush.xpose.msra.mxu0 0.0
        %578 = vmatpush.xpose.msra.mxu0 0.0
        %579 = vmatpush.xpose.msra.mxu0 0.0
        %580 = vmatpush.xpose.msra.mxu0 0.0
        %581 = vmatpush.xpose.msra.mxu0 0.0
        %582 = vmatpush.xpose.msra.mxu0 0.0
        %583 = vmatpush.xpose.msra.mxu0 0.0
        %584 = vmatpush.xpose.msra.mxu0 0.0
        %585 = vmatpush.xpose.msra.mxu0 0.0
        %586 = vmatpush.xpose.msra.mxu0 0.0
        %587 = vmatpush.xpose.msra.mxu0 %v570
        %588 = vmatmul.f32.gmra.mxu0 %v568
        %v589 = vpop.f32.mrf.mxu0
        %v590 = vadd.f32 0.0, %v589
        %591 = vdwg.mxu0
        %v592 = vsel %vm398, %v590, -inf
        %593 = vmax.xlane.f32.xlu0 %v592
        %v594 = vpop.xlane.xlu0 %593
        %v595 = vsub.f32 %v590, %v594
        %v596 = vmul.f32 %v595, 1.442695
        %v597 = vpow.pop %v596
        %v598 = vsel %vm398, %v597, 0.0
        %599 = vadd.xlane.f32.xlu0 %v598
        %v600 = vpop.xlane.xlu0 %599
        %602 = vrot.lane.b32.xlu0 %v562, 112
        %v603 = vpop.permute.xlu0 %602
        %v606 = vsel %vm398, %v597, 0
        %608 = vmatpush.msra.mxu0 0.0
        %609 = vmatpush.msra.mxu0 0.0
        %610 = vmatpush.msra.mxu0 0.0
        %611 = vmatpush.msra.mxu0 0.0
        %612 = vmatpush.msra.mxu0 0.0
        %613 = vmatpush.msra.mxu0 0.0
        %614 = vmatpush.msra.mxu0 0.0
        %615 = vmatpush.msra.mxu0 0.0
        %616 = vmatpush.msra.mxu0 0.0
        %617 = vmatpush.msra.mxu0 0.0
        %618 = vmatpush.msra.mxu0 0.0
        %619 = vmatpush.msra.mxu0 0.0
        %620 = vmatpush.msra.mxu0 0.0
        %621 = vmatpush.msra.mxu0 0.0
        %622 = vmatpush.msra.mxu0 0.0
        %623 = vmatpush.msra.mxu0 %v603
        %624 = vmatmul.f32.gmra.mxu0 %v606
        %v625 = vpop.f32.mrf.mxu0
        %v626 = vadd.f32 0.0, %v625
        %627 = vdwg.mxu0
        %v628 = vrcp.pop %v600
        %v629 = vmul.f32 %v600, %v628
        %v630 = vsub.f32 1.0, %v629
        %v631 = vmul.f32 %v628, %v630
        %v632 = vadd.f32 %v628, %v631
        %vm633 = vweird.f32 %v600
        %vm634 = vweird.f32 %v628
        %vm635 = vmor %vm633, %vm634
        %v636 = vsel %vm635, %v628, %v632
        %v637 = vand.u32 2147483647, %v600
        %vm638 = vcmp.eq.f32.partialorder %v637, 8.507059e+37
        %v639 = vand.u32 %v600, 2147483648
        %v640 = vor.u32 1.1754944e-38, %v639
        %v641 = vsel %vm638, %v640, %v636
        %v642 = vmul.f32 %v626, %v641
        %644 = vrot.lane.b32.xlu0 %v642, 16
        %v645 = vpop.permute.xlu0 %644
        %vm647 = vcmask 195712
        %648 = vst.msk [vmem:[#allocation4] sm:$0xff] %vm647, %v645
        %v649 = vld [vmem:[#allocation2] sm:$0xff]
        %v650 = vld [vmem:[#allocation3] sm:$0xff]
        %651 = vrot.lane.b32.xlu0 %v394, 104
        %v652 = vpop.permute.xlu0 %651
        %654 = vrot.lane.b32.xlu0 %v649, 104
        %v655 = vpop.permute.xlu0 %654
        %v656 = vsel %vm398, %v652, 0
        %v658 = vsel %vm398, %v655, 0
        %660 = vmatpush.xpose.msra.mxu0 0.0
        %661 = vmatpush.xpose.msra.mxu0 0.0
        %662 = vmatpush.xpose.msra.mxu0 0.0
        %663 = vmatpush.xpose.msra.mxu0 0.0
        %664 = vmatpush.xpose.msra.mxu0 0.0
        %665 = vmatpush.xpose.msra.mxu0 0.0
        %666 = vmatpush.xpose.msra.mxu0 0.0
        %667 = vmatpush.xpose.msra.mxu0 0.0
        %668 = vmatpush.xpose.msra.mxu0 0.0
        %669 = vmatpush.xpose.msra.mxu0 0.0
        %670 = vmatpush.xpose.msra.mxu0 0.0
        %671 = vmatpush.xpose.msra.mxu0 0.0
        %672 = vmatpush.xpose.msra.mxu0 0.0
        %673 = vmatpush.xpose.msra.mxu0 0.0
        %674 = vmatpush.xpose.msra.mxu0 0.0
        %675 = vmatpush.xpose.msra.mxu0 %v658
        %676 = vmatmul.f32.gmra.mxu0 %v656
        %v677 = vpop.f32.mrf.mxu0
        %v678 = vadd.f32 0.0, %v677
        %679 = vdwg.mxu0
        %v680 = vsel %vm398, %v678, -inf
        %681 = vmax.xlane.f32.xlu0 %v680
        %v682 = vpop.xlane.xlu0 %681
        %v683 = vsub.f32 %v678, %v682
        %v684 = vmul.f32 %v683, 1.442695
        %v685 = vpow.pop %v684
        %v686 = vsel %vm398, %v685, 0.0
        %687 = vadd.xlane.f32.xlu0 %v686
        %v688 = vpop.xlane.xlu0 %687
        %690 = vrot.lane.b32.xlu0 %v650, 104
        %v691 = vpop.permute.xlu0 %690
        %v694 = vsel %vm398, %v685, 0
        %696 = vmatpush.msra.mxu0 0.0
        %697 = vmatpush.msra.mxu0 0.0
        %698 = vmatpush.msra.mxu0 0.0
        %699 = vmatpush.msra.mxu0 0.0
        %700 = vmatpush.msra.mxu0 0.0
        %701 = vmatpush.msra.mxu0 0.0
        %702 = vmatpush.msra.mxu0 0.0
        %703 = vmatpush.msra.mxu0 0.0
        %704 = vmatpush.msra.mxu0 0.0
        %705 = vmatpush.msra.mxu0 0.0
        %706 = vmatpush.msra.mxu0 0.0
        %707 = vmatpush.msra.mxu0 0.0
        %708 = vmatpush.msra.mxu0 0.0
        %709 = vmatpush.msra.mxu0 0.0
        %710 = vmatpush.msra.mxu0 0.0
        %711 = vmatpush.msra.mxu0 %v691
        %712 = vmatmul.f32.gmra.mxu0 %v694
        %v713 = vpop.f32.mrf.mxu0
        %v714 = vadd.f32 0.0, %v713
        %715 = vdwg.mxu0
        %v716 = vrcp.pop %v688
        %v717 = vmul.f32 %v688, %v716
        %v718 = vsub.f32 1.0, %v717
        %v719 = vmul.f32 %v716, %v718
        %v720 = vadd.f32 %v716, %v719
        %vm721 = vweird.f32 %v688
        %vm722 = vweird.f32 %v716
        %vm723 = vmor %vm721, %vm722
        %v724 = vsel %vm723, %v716, %v720
        %v725 = vand.u32 2147483647, %v688
        %vm726 = vcmp.eq.f32.partialorder %v725, 8.507059e+37
        %v727 = vand.u32 %v688, 2147483648
        %v728 = vor.u32 1.1754944e-38, %v727
        %v729 = vsel %vm726, %v728, %v724
        %v730 = vmul.f32 %v714, %v729
        %732 = vrot.lane.b32.xlu0 %v730, 24
        %v733 = vpop.permute.xlu0 %732
        %vm735 = vcmask 261312
        %736 = vst.msk [vmem:[#allocation4] sm:$0xff] %vm735, %v733
        %v737 = vld [vmem:[#allocation4] sm:$0xff]
        %v738 = vadd.f32 %v737, %v367
        %v739 = vsel %vm372, %v738, 0.0
        %740 = vadd.xlane.f32.xlu0 %v739
        %v741 = vpop.xlane.xlu0 %740
        %v742 = vrcp.pop 32.0
        %v743 = vmul.f32 32.0, %v742
        %v744 = vsub.f32 1.0, %v743
        %v745 = vmul.f32 %v742, %v744
        %v746 = vadd.f32 %v742, %v745
        %vm747 = vweird.f32 %v742
        %v748 = vsel %vm747, %v742, %v746
        %v749 = vmul.f32 %v741, %v748
        %v750 = vsub.f32 %v738, %v749
        %v751 = vmul.f32 %v750, %v750
        %v752 = vsel %vm372, %v751, 0.0
        %753 = vadd.xlane.f32.xlu0 %v752
        %v754 = vpop.xlane.xlu0 %753
        %v755 = vmul.f32 %v754, %v748
        %v756 = vadd.f32 %v755, 1e-05
        %v757 = vrsqrt.pop %v756
        %v758 = vmul.f32 %v757, %v756
        %v759 = vmul.f32 %v758, %v757
        %v760 = vmul.f32 0.5, %v759
        %v761 = vsub.f32 1.5, %v760
        %v762 = vmul.f32 %v757, %v761
        %vm763 = vweird.f32 %v756
        %vm764 = vweird.f32 %v757
        %vm765 = vmor %vm763, %vm764
        %v766 = vsel %vm765, %v757, %v762
        %v767 = vmul.f32 %v750, %v766
        %v768 = vld [vmem:[%s4] sm:$0x1]
        %v770 = vperm.slane %v768, 0
        %v772 = vmul.f32 %v767, %v770
        %773 = vst.msk [vmem:[%s305] sm:$0xff] %vm372, %v772
        %s774 = sand.u32 %s156, 1
        %s775 = scalar_lea.sflag [#allocation7], %s774
        %s776 = sand.u32 %s156, 1
        %s777 = smul.addr %s776, 8
        %s778 = scalar_lea.vmem [#allocation13], %s777
        // Predicated region
        $region61: #{tpu_custom_call.1} parent=39 // pred_check
          %p779 = pneg %p166
        $region62: #{tpu_custom_call.1} parent=39 // pred_check_branch
          %781 = sbr.rel (%p779) target = $region64
        $region63: #{tpu_custom_call.1} parent=39 // pred_region
          %783 = vsyncadd %s775, 0
          %s784 = sadd.s32 %s29, %s28
          %s785 = smul.addr %s784, 8
          %s786 = scalar_lea.hbm %s5, %s785
          %s788 = sshll.u32 %s778, 4
          %s789 = int_to_ptr.vmem [resolvable:$true] %s788
          %s790 = sshll.u32 %s786, 4
          %s791 = int_to_ptr.hbm [resolvable:$true] %s790
          %793 = dma.vmem_to_hbm [thread:$0]  %s789, 128, %s791, %s775
        $region64: #{tpu_custom_call.1} parent=39 // pred_fallthru
          _
      $region40: #{tpu_custom_call.1} parent=5 // pred_fallthru
        _
      %p794 = scmp.le.s32.totalorder 2, %s19
      // Predicated region
      $region65: #{tpu_custom_call.1} parent=5 // pred_check
        %p795 = pneg %p794
      $region66: #{tpu_custom_call.1} parent=5 // pred_check_branch
        %797 = sbr.rel (%p795) target = $region68
      $region67: #{tpu_custom_call.1} parent=5 // pred_region
        %s798 = ssub.s32 %s19, 2
        // Predicated region
        $region69: #{tpu_custom_call.1} parent=67 // pred_check
          %p799 = pneg %p172
        $region70: #{tpu_custom_call.1} parent=67 // pred_check_branch
          %801 = sbr.rel (%p799) target = $region72
        $region71: #{tpu_custom_call.1} parent=67 // pred_region
          %s802 = sand.u32 %s157, 1
          %s803 = scalar_lea.sflag [#allocation7], %s802
          %s804 = sand.u32 %s157, 1
          %s805 = smul.addr %s804, 8
          %s806 = scalar_lea.vmem [#allocation13], %s805
          %808 = dma.done %s803, 128
        $region72: #{tpu_custom_call.1} parent=67 // pred_fallthru
          _
      $region68: #{tpu_custom_call.1} parent=5 // pred_fallthru
        _
    $region6: #{tpu_custom_call.1} parent=1 // loop_footer
      %s23 = sadd.s32 1, %s19
    $region7: #{tpu_custom_call.1} parent=1 // loop_footer_branch
      %18 = sbr.rel target = $region3
    $region8: #{tpu_custom_call.1} parent=1 // loop_exit
      _
    %809 = vsyncpa [#allocation6], 1
    %s810 = scalar_lea.sflag [#allocation6], 1
    %811 = vsyncpa %s810, 1
    %812 = vsyncpa [#allocation9], 1
    %813 = vsyncpa [#allocation12], 1
    %814 = vsyncpa [#allocation7], 1
    %s815 = scalar_lea.sflag [#allocation7], 1
    %816 = vsyncpa %s815, 1

</llo_original>
